<compile_context>
chip_gen: v7x
topology: tpu7x:2x2x1
jax: 0.10.0
libtpu: 0.0.40
codegen_flags: <defaults>
</compile_context>

<pallas_src>
import jax
import jax.numpy as jnp
from jax.experimental import pallas as pl
from jax.experimental.pallas import tpu as pltpu


def _round_up(v: int, m: int) -> int:
    return -(-v // m) * m


def _static_encoder_kernel(x_ref, w1_ref, b1_ref, w2_ref, b2_ref, o_ref):
    """Fused MLP forward for one batch tile.

    x_ref  : (TB, n_static)   input tile
    w1_ref : (n_static, H)    first linear weight, transposed
    b1_ref : (1, H)           first linear bias
    w2_ref : (H, E)           second linear weight, transposed
    b2_ref : (1, E)           second linear bias
    o_ref  : (TB, E)          output tile
    """
    x = x_ref[...]
    h = jnp.dot(x, w1_ref[...], preferred_element_type=jnp.float32) + b1_ref[...]
    h = jnp.maximum(h, 0.0)                                   # ReLU
    y = jnp.dot(h, w2_ref[...], preferred_element_type=jnp.float32) + b2_ref[...]
    o_ref[...] = y.astype(o_ref.dtype)


def static_encoder_forward(x, w1_t, b1, w2_t, b2, *, max_batch_tile=4096):
    """Run the fused MLP.  x: (B, n_static) float32 -> (B, emb_dim) float32."""
    B, n_static = x.shape
    hidden = w1_t.shape[1]
    emb_dim = w2_t.shape[1]

    # Pad batch only to the f32 sublane count (8).
    b_pad = max(8, _round_up(B, 8))

    # Tile count: each tile <= max_batch_tile, and at least 2 once the batch
    # is large enough to be worth splitting across v7x's two TensorCores.
    num_tiles = max(pl.cdiv(b_pad, max_batch_tile), 2 if b_pad >= 1024 else 1)
    tb = _round_up(pl.cdiv(b_pad, num_tiles), 8)
    b_pad = tb * num_tiles

    if b_pad != B:
        x = jnp.pad(x, ((0, b_pad - B), (0, 0)))

    flops = 2 * b_pad * (n_static * hidden + hidden * emb_dim)
    bytes_accessed = 4 * (b_pad * n_static + n_static * hidden + hidden
                          + hidden * emb_dim + emb_dim + b_pad * emb_dim)

    out = pl.pallas_call(
        _static_encoder_kernel,
        out_shape=jax.ShapeDtypeStruct((b_pad, emb_dim), jnp.float32),
        grid_spec=pltpu.PrefetchScalarGridSpec(
            num_scalar_prefetch=0,
            grid=(num_tiles,),
            in_specs=[
                pl.BlockSpec((tb, n_static), lambda i: (i, 0)),      # x tile
                pl.BlockSpec((n_static, hidden), lambda i: (0, 0)),  # W1^T (resident)
                pl.BlockSpec((1, hidden), lambda i: (0, 0)),         # b1   (resident)
                pl.BlockSpec((hidden, emb_dim), lambda i: (0, 0)),   # W2^T (resident)
                pl.BlockSpec((1, emb_dim), lambda i: (0, 0)),        # b2   (resident)
            ],
            out_specs=pl.BlockSpec((tb, emb_dim), lambda i: (i, 0)),
        ),
        compiler_params=pltpu.CompilerParams(
            dimension_semantics=("parallel",),   # batch tiles are independent
        ),
        cost_estimate=pl.CostEstimate(
            flops=flops, transcendentals=0, bytes_accessed=bytes_accessed),
    )(x, w1_t, b1, w2_t, b2)

    if b_pad != B:
        out = out[:B]          # skipped when the batch is already aligned
    return out


def init_static_encoder_params(key, n_static, emb_dim=32, hidden=None):
    """Deterministic init matching nn.Linear default U(-1/sqrt(fan_in), 1/sqrt(fan_in))."""
    hidden = hidden or 2 * emb_dim
    k1, k2, k3, k4 = jax.random.split(key, 4)

    bound1 = 1.0 / float(n_static) ** 0.5
    w1 = jax.random.uniform(k1, (hidden, n_static),
                            minval=-bound1, maxval=bound1, dtype=jnp.float32)
    b1 = jax.random.uniform(k2, (hidden,),
                            minval=-bound1, maxval=bound1, dtype=jnp.float32)

    bound2 = 1.0 / float(hidden) ** 0.5
    w2 = jax.random.uniform(k3, (emb_dim, hidden),
                            minval=-bound2, maxval=bound2, dtype=jnp.float32)
    b2 = jax.random.uniform(k4, (emb_dim,),
                            minval=-bound2, maxval=bound2, dtype=jnp.float32)

    # Store transposed weights and 2-D biases for the kernel.
    return w1.T, b1[None, :], w2.T, b2[None, :]


class StaticEncoderPallas:
    """JAX/Pallas equivalent of the PyTorch StaticEncoder (MLP embedder)."""

    def __init__(self, n_static, emb_dim=32, hidden=None, key=None):
        if key is None:
            key = jax.random.PRNGKey(0)
        self.emb_dim = emb_dim
        self.hidden = hidden or 2 * emb_dim
        self.params = init_static_encoder_params(key, n_static, emb_dim, self.hidden)

    def __call__(self, x):
        w1_t, b1, w2_t, b2 = self.params
        return static_encoder_forward(x.astype(jnp.float32), w1_t, b1, w2_t, b2)


if __name__ == "__main__":
    n_static, emb_dim = 4, 32   # hidden defaults to 2*emb_dim = 64

    key = jax.random.PRNGKey(0)
    pkey, xkey1, xkey2 = jax.random.split(key, 3)

    encoder = StaticEncoderPallas(n_static, emb_dim=emb_dim, key=pkey)
    w1_t, b1, w2_t, b2 = encoder.params

    # Case 1: unaligned batch (exercises pad + slice path).
    B1 = 2
    x1 = jax.random.normal(xkey1, (B1, n_static), dtype=jnp.float32)
    out1 = encoder(x1)
    jax.block_until_ready(out1)
    assert out1.shape == (B1, emb_dim), out1.shape
    assert out1.dtype == jnp.float32
    ref1 = jnp.maximum(x1 @ w1_t + b1, 0.0) @ w2_t + b2
    assert jnp.allclose(out1, ref1, atol=1e-5, rtol=1e-5)

    # Case 2: sublane-aligned batch (exercises no-pad / no-slice fast path).
    B2 = 8
    x2 = jax.random.normal(xkey2, (B2, n_static), dtype=jnp.float32)
    out2 = encoder(x2)
    jax.block_until_ready(out2)
    assert out2.shape == (B2, emb_dim), out2.shape
    ref2 = jnp.maximum(x2 @ w1_t + b1, 0.0) @ w2_t + b2
    assert jnp.allclose(out2, ref2, atol=1e-5, rtol=1e-5)

    print("KERNEL_OK")
</pallas_src>

<mosaic_0001>
module attributes {stable_mosaic.version = 11 : i64} {
  func.func @_static_encoder_kernel(%arg0: i32, %arg1: memref<8x4xf32, #tpu.memory_space<vmem>>, %arg2: memref<4x64xf32, #tpu.memory_space<vmem>>, %arg3: memref<1x64xf32, #tpu.memory_space<vmem>>, %arg4: memref<64x32xf32, #tpu.memory_space<vmem>>, %arg5: memref<1x32xf32, #tpu.memory_space<vmem>>, %arg6: memref<8x32xf32, #tpu.memory_space<vmem>>) attributes {dimension_semantics = [#tpu.dimension_semantics<parallel>], iteration_bounds = array<i64: 1>, scalar_prefetch = 0 : i64, scratch_operands = 0 : i64, tpu.core_type = #tpu.core_type<tc>, window_params = [{transform_indices = @transform_0, window_bounds = array<i64: 8, 4>}, {pipeline_mode = #tpu.pipeline_mode<synchronous>, transform_indices = @transform_1, window_bounds = array<i64: 4, 64>}, {pipeline_mode = #tpu.pipeline_mode<synchronous>, transform_indices = @transform_2, window_bounds = array<i64: 1, 64>}, {pipeline_mode = #tpu.pipeline_mode<synchronous>, transform_indices = @transform_3, window_bounds = array<i64: 64, 32>}, {pipeline_mode = #tpu.pipeline_mode<synchronous>, transform_indices = @transform_4, window_bounds = array<i64: 1, 32>}, {transform_indices = @transform_5, window_bounds = array<i64: 8, 32>}]} {
    %c0 = arith.constant 0 : index
    %c0_0 = arith.constant 0 : index
    %0 = vector.load %arg1[%c0, %c0_0] : memref<8x4xf32, #tpu.memory_space<vmem>>, vector<8x4xf32>
    %c0_1 = arith.constant 0 : index
    %c0_2 = arith.constant 0 : index
    %1 = vector.load %arg2[%c0_1, %c0_2] : memref<4x64xf32, #tpu.memory_space<vmem>>, vector<4x64xf32>
    %cst = arith.constant dense<0.000000e+00> : vector<8x64xf32>
    %2 = tpu.matmul %0, %1, %cst {dimension_numbers = #tpu.dot_dimension_numbers<[1], [0], [0], [1], [0, 0, 1, 1], [], []>} : vector<8x4xf32>, vector<4x64xf32>, vector<8x64xf32> -> vector<8x64xf32>
    %c0_3 = arith.constant 0 : index
    %c0_4 = arith.constant 0 : index
    %3 = vector.load %arg3[%c0_3, %c0_4] : memref<1x64xf32, #tpu.memory_space<vmem>>, vector<1x64xf32>
    %4 = vector.broadcast %3 : vector<1x64xf32> to vector<8x64xf32>
    %5 = arith.addf %2, %4 : vector<8x64xf32>
    %cst_5 = arith.constant 0.000000e+00 : f32
    %6 = vector.broadcast %cst_5 : f32 to vector<8x64xf32>
    %7 = arith.maximumf %5, %6 : vector<8x64xf32>
    %c0_6 = arith.constant 0 : index
    %c0_7 = arith.constant 0 : index
    %8 = vector.load %arg4[%c0_6, %c0_7] : memref<64x32xf32, #tpu.memory_space<vmem>>, vector<64x32xf32>
    %cst_8 = arith.constant dense<0.000000e+00> : vector<8x32xf32>
    %9 = tpu.matmul %7, %8, %cst_8 {dimension_numbers = #tpu.dot_dimension_numbers<[1], [0], [0], [1], [0, 0, 1, 1], [], []>} : vector<8x64xf32>, vector<64x32xf32>, vector<8x32xf32> -> vector<8x32xf32>
    %c0_9 = arith.constant 0 : index
    %c0_10 = arith.constant 0 : index
    %10 = vector.load %arg5[%c0_9, %c0_10] : memref<1x32xf32, #tpu.memory_space<vmem>>, vector<1x32xf32>
    %11 = vector.broadcast %10 : vector<1x32xf32> to vector<8x32xf32>
    %12 = arith.addf %9, %11 : vector<8x32xf32>
    %c0_11 = arith.constant 0 : index
    %c0_12 = arith.constant 0 : index
    %13 = vector.load %arg6[%c0_11, %c0_12] : memref<8x32xf32, #tpu.memory_space<vmem>>, vector<8x32xf32>
    tpu.vector_store %arg6[%c0_11, %c0_12], %12 {strides = array<i32>} : memref<8x32xf32, #tpu.memory_space<vmem>>, vector<8x32xf32>,
    return
  }
  func.func @transform_0(%arg0: i32) -> (i32, i32) {
    %c0_i32 = arith.constant 0 : i32
    %c0_i32_0 = arith.constant 0 : i32
    return %arg0, %c0_i32 : i32, i32
  }
  func.func @transform_1(%arg0: i32) -> (i32, i32) {
    %c0_i32 = arith.constant 0 : i32
    %c0_i32_0 = arith.constant 0 : i32
    %c0_i32_1 = arith.constant 0 : i32
    return %c0_i32, %c0_i32_0 : i32, i32
  }
  func.func @transform_2(%arg0: i32) -> (i32, i32) {
    %c0_i32 = arith.constant 0 : i32
    %c0_i32_0 = arith.constant 0 : i32
    %c0_i32_1 = arith.constant 0 : i32
    return %c0_i32, %c0_i32_0 : i32, i32
  }
  func.func @transform_3(%arg0: i32) -> (i32, i32) {
    %c0_i32 = arith.constant 0 : i32
    %c0_i32_0 = arith.constant 0 : i32
    %c0_i32_1 = arith.constant 0 : i32
    return %c0_i32, %c0_i32_0 : i32, i32
  }
  func.func @transform_4(%arg0: i32) -> (i32, i32) {
    %c0_i32 = arith.constant 0 : i32
    %c0_i32_0 = arith.constant 0 : i32
    %c0_i32_1 = arith.constant 0 : i32
    return %c0_i32, %c0_i32_0 : i32, i32
  }
  func.func @transform_5(%arg0: i32) -> (i32, i32) {
    %c0_i32 = arith.constant 0 : i32
    %c0_i32_0 = arith.constant 0 : i32
    return %arg0, %c0_i32 : i32, i32
  }
}

</mosaic_0001>

<llo_original>
// kernel: tpu_custom_call.1
$region0: #{tpu_custom_call.1}
  #allocation0 [shape = 'u32[]', space=smem, size = 0x4, offset = 0x4, fixed_abs, tag = 'smem constant byte address 0x4 - core index']
  #allocation1 [shape = 'u32[144,128]{1,0:T(1,128)}', space=vmem, size = 0x12000, scoped, tag = 'internal scratch']
  %s0 = inlined_call_operand.vmem [shape: f32[8,4], index: 0, kind: input, shape index: {}]
  %s1 = inlined_call_operand.vmem [shape: f32[4,64], index: 1, kind: input, shape index: {}]
  %s2 = inlined_call_operand.vmem [shape: f32[1,64], index: 2, kind: input, shape index: {}]
  %s3 = inlined_call_operand.vmem [shape: f32[64,32], index: 3, kind: input, shape index: {}]
  %s4 = inlined_call_operand.vmem [shape: f32[1,32], index: 4, kind: input, shape index: {}]
  %s5 = inlined_call_operand.hbm [shape: f32[8,32], index: 5, kind: output, shape index: {}]
  %s6 = sld [smem:[#allocation0]]
  $region30: #{tpu_custom_call.1} parent=0
    _
  %s8 = ssub.s32 1, %s6
  %s9 = scalar_select 0, %s8, %s6
  $region1: #{tpu_custom_call.1} parent=0
    #allocation2 [shape = 'u8[4096]{0}', space=vmem, size = 0x1000, scoped, tag = 'output window, operand 0, single buffered']
    #allocation3 [shape = 's32[1]{0}', space=sflag, size = 0x4, scoped, tag = 'scoped memory for tpu_custom_call.1']
    %10 = vsyncpa [#allocation3], 0
    // Predicated region
    $region2: #{tpu_custom_call.1} parent=1 // pred_check
      _
    $region3: #{tpu_custom_call.1} parent=1 // pred_check_branch
      %12 = sbr.rel (0) target = $region5
    $region4: #{tpu_custom_call.1} parent=1 // pred_region
      _
    $region5: #{tpu_custom_call.1} parent=1 // pred_fallthru
      _
    // Predicated region
    $region6: #{tpu_custom_call.1} parent=1 // pred_check
      _
    $region7: #{tpu_custom_call.1} parent=1 // pred_check_branch
      %14 = sbr.rel (0) target = $region9
    $region8: #{tpu_custom_call.1} parent=1 // pred_region
      _
    $region9: #{tpu_custom_call.1} parent=1 // pred_fallthru
      _
    // Predicated region
    $region10: #{tpu_custom_call.1} parent=1 // pred_check
      _
    $region11: #{tpu_custom_call.1} parent=1 // pred_check_branch
      %16 = sbr.rel (0) target = $region13
    $region12: #{tpu_custom_call.1} parent=1 // pred_region
      _
    $region13: #{tpu_custom_call.1} parent=1 // pred_fallthru
      _
    // Predicated region
    $region14: #{tpu_custom_call.1} parent=1 // pred_check
      _
    $region15: #{tpu_custom_call.1} parent=1 // pred_check_branch
      %18 = sbr.rel (0) target = $region17
    $region16: #{tpu_custom_call.1} parent=1 // pred_region
      _
    $region17: #{tpu_custom_call.1} parent=1 // pred_fallthru
      _
    // Predicated region
    $region18: #{tpu_custom_call.1} parent=1 // pred_check
      _
    $region19: #{tpu_custom_call.1} parent=1 // pred_check_branch
      %20 = sbr.rel (0) target = $region21
    $region20: #{tpu_custom_call.1} parent=1 // pred_region
      _
    $region21: #{tpu_custom_call.1} parent=1 // pred_fallthru
      _
    %v21 = vld [vmem:[%s0] sm:$0xff]
    %v22 = vld [vmem:[%s1] sm:$0xf]
    %v23 = vld [vmem:[%s2] sm:$0x1]
    %v25 = vlaneseq
    %v26 = vshrl.u32 %v25, 7
    %v27 = vsub.s32 0, %v26
    %v28 = vrot.slane %v23, %v27
    %vm30 = vcmask 31744
    %v32 = vsel %vm30, %v21, 0
    %vm34 = vcmask 1043456
    %v36 = vsel %vm34, %v22, 0
    %38 = vmatprep.subr.mxu0 0.0
    %39 = vmatpush1.msra.mxu0 %v36
    %40 = vmatprep.subr.mxu0 0.0
    %41 = vmatpush1.msra.mxu0 0.0
    %42 = vmatprep.subr.mxu0 0.0
    %43 = vmatpush1.msra.mxu0 0.0
    %44 = vmatprep.subr.mxu0 0.0
    %45 = vmatpush1.msra.mxu0 0.0
    %46 = vmatprep.subr.mxu0 0.0
    %47 = vmatpush1.msra.mxu0 0.0
    %48 = vmatprep.subr.mxu0 0.0
    %49 = vmatpush1.msra.mxu0 0.0
    %50 = vmatprep.subr.mxu0 0.0
    %51 = vmatpush1.msra.mxu0 0.0
    %52 = vmatprep.subr.mxu0 0.0
    %53 = vmatpush1.msra.mxu0 0.0
    %54 = vmatprep.subr.mxu0 0.0
    %55 = vmatpush1.msra.mxu0 0.0
    %56 = vmatprep.subr.mxu0 0.0
    %57 = vmatpush1.msra.mxu0 0.0
    %58 = vmatprep.subr.mxu0 0.0
    %59 = vmatpush1.msra.mxu0 0.0
    %60 = vmatprep.subr.mxu0 0.0
    %61 = vmatpush1.msra.mxu0 0.0
    %62 = vmatprep.subr.mxu0 0.0
    %63 = vmatpush1.msra.mxu0 0.0
    %64 = vmatprep.subr.mxu0 0.0
    %65 = vmatpush1.msra.mxu0 0.0
    %66 = vmatprep.subr.mxu0 0.0
    %67 = vmatpush1.msra.mxu0 0.0
    %68 = vmatprep.subr.mxu0 0.0
    %69 = vmatpush1.msra.mxu0 0.0
    %70 = vmatprep.subr.mxu0 0.0
    %71 = vmatpush1.msra.mxu0 0.0
    %72 = vmatprep.subr.mxu0 0.0
    %73 = vmatpush1.msra.mxu0 0.0
    %74 = vmatprep.subr.mxu0 0.0
    %75 = vmatpush1.msra.mxu0 0.0
    %76 = vmatprep.subr.mxu0 0.0
    %77 = vmatpush1.msra.mxu0 0.0
    %78 = vmatprep.subr.mxu0 0.0
    %79 = vmatpush1.msra.mxu0 0.0
    %80 = vmatprep.subr.mxu0 0.0
    %81 = vmatpush1.msra.mxu0 0.0
    %82 = vmatprep.subr.mxu0 0.0
    %83 = vmatpush1.msra.mxu0 0.0
    %84 = vmatprep.subr.mxu0 0.0
    %85 = vmatpush1.msra.mxu0 0.0
    %86 = vmatprep.subr.mxu0 0.0
    %87 = vmatpush1.msra.mxu0 0.0
    %88 = vmatprep.subr.mxu0 0.0
    %89 = vmatpush1.msra.mxu0 0.0
    %90 = vmatprep.subr.mxu0 0.0
    %91 = vmatpush1.msra.mxu0 0.0
    %92 = vmatprep.subr.mxu0 0.0
    %93 = vmatpush1.msra.mxu0 0.0
    %94 = vmatprep.subr.mxu0 0.0
    %95 = vmatpush1.msra.mxu0 0.0
    %96 = vmatprep.subr.mxu0 0.0
    %97 = vmatpush1.msra.mxu0 0.0
    %98 = vmatprep.subr.mxu0 0.0
    %99 = vmatpush1.msra.mxu0 0.0
    %100 = vmatprep.subr.mxu0 0.0
    %101 = vmatpush1.msra.mxu0 0.0
    %102 = vmatprep.mubr.f32.mxu0 0.0
    %103 = vmatmul.mubr.f32.gmra.mrb[0].mxu0 %v32
    %v104 = vpop.f32.mrb[0].mxu0
    %v105 = vadd.f32 %v28, %v104
    %v106 = vpop.f32.mrb[0].mxu0
    %107 = vdwg.mxu0
    %v108 = vmax.f32 %v105, 0.0
    %v109 = vld [vmem:[%s3] sm:$0xff]
    %v110 = vld [vmem:[%s3 + $0x8] sm:$0xff]
    %v111 = vld [vmem:[%s3 + $0x10] sm:$0xff]
    %v112 = vld [vmem:[%s3 + $0x18] sm:$0xff]
    %v113 = vld [vmem:[%s3 + $0x20] sm:$0xff]
    %v114 = vld [vmem:[%s3 + $0x28] sm:$0xff]
    %v115 = vld [vmem:[%s3 + $0x30] sm:$0xff]
    %v116 = vld [vmem:[%s3 + $0x38] sm:$0xff]
    %v117 = vld [vmem:[%s4] sm:$0x1]
    %v119 = vlaneseq
    %v120 = vshrl.u32 %v119, 7
    %v121 = vsub.s32 0, %v120
    %v122 = vrot.slane %v117, %v121
    %vm124 = vcmask 523264
    %v126 = vsel %vm124, %v108, 0
    %128 = vmatprep.subr.mxu0 0.0
    %129 = vmatpush1.msra.mxu0 %v109
    %130 = vmatprep.subr.mxu0 0.0
    %131 = vmatpush1.msra.mxu0 %v110
    %132 = vmatprep.subr.mxu0 0.0
    %133 = vmatpush1.msra.mxu0 %v111
    %134 = vmatprep.subr.mxu0 0.0
    %135 = vmatpush1.msra.mxu0 %v112
    %136 = vmatprep.subr.mxu0 0.0
    %137 = vmatpush1.msra.mxu0 %v113
    %138 = vmatprep.subr.mxu0 0.0
    %139 = vmatpush1.msra.mxu0 %v114
    %140 = vmatprep.subr.mxu0 0.0
    %141 = vmatpush1.msra.mxu0 %v115
    %142 = vmatprep.subr.mxu0 0.0
    %143 = vmatpush1.msra.mxu0 %v116
    %144 = vmatprep.subr.mxu0 0.0
    %145 = vmatpush1.msra.mxu0 0.0
    %146 = vmatprep.subr.mxu0 0.0
    %147 = vmatpush1.msra.mxu0 0.0
    %148 = vmatprep.subr.mxu0 0.0
    %149 = vmatpush1.msra.mxu0 0.0
    %150 = vmatprep.subr.mxu0 0.0
    %151 = vmatpush1.msra.mxu0 0.0
    %152 = vmatprep.subr.mxu0 0.0
    %153 = vmatpush1.msra.mxu0 0.0
    %154 = vmatprep.subr.mxu0 0.0
    %155 = vmatpush1.msra.mxu0 0.0
    %156 = vmatprep.subr.mxu0 0.0
    %157 = vmatpush1.msra.mxu0 0.0
    %158 = vmatprep.subr.mxu0 0.0
    %159 = vmatpush1.msra.mxu0 0.0
    %160 = vmatprep.subr.mxu0 0.0
    %161 = vmatpush1.msra.mxu0 0.0
    %162 = vmatprep.subr.mxu0 0.0
    %163 = vmatpush1.msra.mxu0 0.0
    %164 = vmatprep.subr.mxu0 0.0
    %165 = vmatpush1.msra.mxu0 0.0
    %166 = vmatprep.subr.mxu0 0.0
    %167 = vmatpush1.msra.mxu0 0.0
    %168 = vmatprep.subr.mxu0 0.0
    %169 = vmatpush1.msra.mxu0 0.0
    %170 = vmatprep.subr.mxu0 0.0
    %171 = vmatpush1.msra.mxu0 0.0
    %172 = vmatprep.subr.mxu0 0.0
    %173 = vmatpush1.msra.mxu0 0.0
    %174 = vmatprep.subr.mxu0 0.0
    %175 = vmatpush1.msra.mxu0 0.0
    %176 = vmatprep.subr.mxu0 0.0
    %177 = vmatpush1.msra.mxu0 0.0
    %178 = vmatprep.subr.mxu0 0.0
    %179 = vmatpush1.msra.mxu0 0.0
    %180 = vmatprep.subr.mxu0 0.0
    %181 = vmatpush1.msra.mxu0 0.0
    %182 = vmatprep.subr.mxu0 0.0
    %183 = vmatpush1.msra.mxu0 0.0
    %184 = vmatprep.subr.mxu0 0.0
    %185 = vmatpush1.msra.mxu0 0.0
    %186 = vmatprep.subr.mxu0 0.0
    %187 = vmatpush1.msra.mxu0 0.0
    %188 = vmatprep.subr.mxu0 0.0
    %189 = vmatpush1.msra.mxu0 0.0
    %190 = vmatprep.subr.mxu0 0.0
    %191 = vmatpush1.msra.mxu0 0.0
    %192 = vmatprep.mubr.f32.mxu0 0.0
    %193 = vmatmul.mubr.f32.gmra.mrb[0].mxu0 %v126
    %v194 = vpop.f32.mrb[0].mxu0
    %v195 = vadd.f32 %v122, %v194
    %v196 = vpop.f32.mrb[0].mxu0
    %197 = vdwg.mxu0
    %vm198 = vcmask 261120
    %199 = vst.msk [vmem:[#allocation2] sm:$0xff] %vm198, %v195
    // Predicated region
    $region22: #{tpu_custom_call.1} parent=1 // pred_check
      _
    $region23: #{tpu_custom_call.1} parent=1 // pred_check_branch
      %201 = sbr.rel (0) target = $region25
    $region24: #{tpu_custom_call.1} parent=1 // pred_region
      %s203 = ssub.s32 128, 128
      %204 = vsyncadd [#allocation3], %s203
      %s206 = sshll.u32 [#allocation2], 4
      %s207 = int_to_ptr.vmem [resolvable:$true] %s206
      %209 = dma.vmem_to_hbm [thread:$0]  %s207, 128, %s5, [#allocation3]
    $region25: #{tpu_custom_call.1} parent=1 // pred_fallthru
      _
    // Predicated region
    $region26: #{tpu_custom_call.1} parent=1 // pred_check
      _
    $region27: #{tpu_custom_call.1} parent=1 // pred_check_branch
      %211 = sbr.rel (0) target = $region29
    $region28: #{tpu_custom_call.1} parent=1 // pred_region
      %212 = dma.done [#allocation3], 128
    $region29: #{tpu_custom_call.1} parent=1 // pred_fallthru
      _
    %213 = vsyncpa [#allocation3], 1

</llo_original>
